<compile_context>
chip_gen: v7x
topology: tpu7x:2x2x1
jax: 0.10.0
libtpu: 0.0.40
codegen_flags: <defaults>
</compile_context>

<pallas_src>
import functools

import jax
import jax.numpy as jnp
from jax.experimental import pallas as pl
from jax.experimental.pallas import tpu as pltpu


def _round_up(x, m):
    return (x + m - 1) // m * m


# ---------------------------------------------------------------------------
# Pass 1: conv tile (MXU, bf16 operands, f32 acc) + per-channel sum / sumsq
# ---------------------------------------------------------------------------
def conv_stats_kernel(p_ref, w_ref, conv_ref, sum_ref, sumsq_ref):
    i = pl.program_id(0)

    conv = jnp.dot(p_ref[...], w_ref[...],
                   preferred_element_type=jnp.float32)       # (TM, Cp) f32
    conv_ref[...] = conv

    @pl.when(i == 0)
    def _():
        sum_ref[...] = jnp.zeros_like(sum_ref)
        sumsq_ref[...] = jnp.zeros_like(sumsq_ref)

    sum_ref[...] += jnp.sum(conv, axis=0, keepdims=True)       # (1, Cp)
    sumsq_ref[...] += jnp.sum(conv * conv, axis=0, keepdims=True)


# ---------------------------------------------------------------------------
# Pass 2: y = conv * scale + shift ; LeakyReLU(0.2)
#   scale = gamma * inv_std ; shift = beta - mean * gamma * inv_std
# ---------------------------------------------------------------------------
def bn_lrelu_kernel(conv_ref, scale_ref, shift_ref, out_ref):
    y = conv_ref[...] * scale_ref[...] + shift_ref[...]
    out_ref[...] = jnp.where(y >= 0.0, y, 0.2 * y).astype(out_ref.dtype)


# ---------------------------------------------------------------------------
# Pallas wrappers
# ---------------------------------------------------------------------------
def _conv_stats_pallas(patches_bf16, w_bf16, tm):
    Mp, Kp = patches_bf16.shape
    Cp = w_bf16.shape[1]
    num_m = Mp // tm
    cost = pl.CostEstimate(
        flops=2 * Mp * Kp * Cp,
        transcendentals=0,
        bytes_accessed=Mp * Kp * 2 + Kp * Cp * 2 + Mp * Cp * 4 + 2 * Cp * 4)
    return pl.pallas_call(
        conv_stats_kernel,
        out_shape=(jax.ShapeDtypeStruct((Mp, Cp), jnp.float32),
                   jax.ShapeDtypeStruct((1, Cp), jnp.float32),
                   jax.ShapeDtypeStruct((1, Cp), jnp.float32)),
        grid_spec=pltpu.PrefetchScalarGridSpec(
            num_scalar_prefetch=0,
            grid=(num_m,),
            in_specs=[
                pl.BlockSpec((tm, Kp), lambda i: (i, 0)),
                pl.BlockSpec((Kp, Cp), lambda i: (0, 0)),
            ],
            out_specs=(
                pl.BlockSpec((tm, Cp), lambda i: (i, 0)),
                pl.BlockSpec((1, Cp), lambda i: (0, 0)),   # resident accumulator
                pl.BlockSpec((1, Cp), lambda i: (0, 0)),   # resident accumulator
            )),
        compiler_params=pltpu.CompilerParams(
            dimension_semantics=("arbitrary",),            # stats accumulate over M
            vmem_limit_bytes=32 * 1024 * 1024),
        cost_estimate=cost,
    )(patches_bf16, w_bf16)


def _bn_lrelu_pallas(conv_full, scale, shift, tm):
    Mp, Cp = conv_full.shape
    num_m = Mp // tm
    cost = pl.CostEstimate(
        flops=3 * Mp * Cp,
        transcendentals=0,
        bytes_accessed=2 * Mp * Cp * 4 + 2 * Cp * 4)
    return pl.pallas_call(
        bn_lrelu_kernel,
        out_shape=jax.ShapeDtypeStruct((Mp, Cp), jnp.float32),
        grid_spec=pltpu.PrefetchScalarGridSpec(
            num_scalar_prefetch=0,
            grid=(num_m,),
            in_specs=[
                pl.BlockSpec((tm, Cp), lambda i: (i, 0)),
                pl.BlockSpec((1, Cp), lambda i: (0, 0)),
                pl.BlockSpec((1, Cp), lambda i: (0, 0)),
            ],
            out_specs=pl.BlockSpec((tm, Cp), lambda i: (i, 0))),
        compiler_params=pltpu.CompilerParams(
            dimension_semantics=("parallel",),             # independent M tiles
            vmem_limit_bytes=32 * 1024 * 1024),
        cost_estimate=cost,
    )(conv_full, scale, shift)


# ---------------------------------------------------------------------------
# Glue: reflect-pad + im2col (plain JAX), weight reshape, NCHW <-> matmul views
# ---------------------------------------------------------------------------
def im2col(x_pad, k, stride):
    # x_pad: (N, C, Hp, Wp) -> (N*OH*OW, C*k*k) with (C, kh, kw) flattening
    N, C, Hp, Wp = x_pad.shape
    OH = (Hp - k) // stride + 1
    OW = (Wp - k) // stride + 1
    cols = []
    for dh in range(k):
        for dw in range(k):
            cols.append(x_pad[:, :, dh:dh + stride * OH:stride,
                                    dw:dw + stride * OW:stride])  # (N,C,OH,OW)
    patches = jnp.stack(cols, axis=2)                # (N, C, k*k, OH, OW)
    patches = patches.transpose(0, 3, 4, 1, 2)       # (N, OH, OW, C, k*k)
    return patches.reshape(N * OH * OW, C * k * k), OH, OW


@functools.partial(jax.jit, static_argnums=(4, 5))
def cnn_block_forward(x, conv_w, gamma, beta, k_size, stride):
    # x: (N, C_in, H, W) f32   conv_w: (C_out, C_in, k, k) f32
    N, C_in, H, W = x.shape
    C_out = conv_w.shape[0]

    x_pad = jnp.pad(x, ((0, 0), (0, 0), (1, 1), (1, 1)), mode="reflect")
    patches, OH, OW = im2col(x_pad, k_size, stride)          # (M, K) f32
    M, K = patches.shape

    # --- lane/sublane-friendly padding ------------------------------------
    Cp = _round_up(max(C_out, 128), 128)                     # lane-dense output
    Kp = _round_up(K, 128)                                   # lane-dense patches
    TM = 512 if M >= 512 else _round_up(M, 8)                # M tile (fits v7x VMEM easily)
    Mp = _round_up(M, TM)

    patches_p = jnp.zeros((Mp, Kp), jnp.bfloat16).at[:M, :K].set(
        patches.astype(jnp.bfloat16))
    w_mat = conv_w.reshape(C_out, C_in * k_size * k_size).T  # (K, C_out)
    w_p = jnp.zeros((Kp, Cp), jnp.bfloat16).at[:K, :C_out].set(
        w_mat.astype(jnp.bfloat16))

    # --- pass 1: conv + per-channel sum / sumsq ----------------------------
    conv_full, csum, csumsq = _conv_stats_pallas(patches_p, w_p, TM)

    # --- tiny per-channel BN math (zero-padded rows/cols contribute 0) -----
    mean = csum / float(M)                                   # (1, Cp)
    var = csumsq / float(M) - mean * mean
    inv_std = jax.lax.rsqrt(var + 1e-5)
    gamma_p = jnp.zeros((1, Cp), jnp.float32).at[0, :C_out].set(gamma)
    beta_p = jnp.zeros((1, Cp), jnp.float32).at[0, :C_out].set(beta)
    scale = gamma_p * inv_std
    shift = beta_p - mean * scale

    # --- pass 2: normalize + LeakyReLU --------------------------------------
    out_flat = _bn_lrelu_pallas(conv_full, scale, shift, TM)

    out = out_flat[:M, :C_out].reshape(N, OH, OW, C_out).transpose(0, 3, 1, 2)
    return out                                               # (N, C_out, OH, OW)


# ---------------------------------------------------------------------------
# Pure-JAX f32 reference (PyTorch semantics) for a self-check
# ---------------------------------------------------------------------------
def cnn_block_reference(x, conv_w, gamma, beta, k_size, stride):
    x_pad = jnp.pad(x, ((0, 0), (0, 0), (1, 1), (1, 1)), mode="reflect")
    conv = jax.lax.conv_general_dilated(
        x_pad, conv_w, window_strides=(stride, stride), padding="VALID",
        dimension_numbers=("NCHW", "OIHW", "NCHW"))
    mean = jnp.mean(conv, axis=(0, 2, 3), keepdims=True)
    var = jnp.mean((conv - mean) ** 2, axis=(0, 2, 3), keepdims=True)
    y = (conv - mean) * jax.lax.rsqrt(var + 1e-5)
    y = y * gamma[None, :, None, None] + beta[None, :, None, None]
    return jnp.where(y >= 0.0, y, 0.2 * y)


if __name__ == "__main__":
    # Small shapes consistent with a pix2pix discriminator block.
    N, C_in, H, W = 2, 4, 16, 16
    C_out, k_size, stride = 8, 4, 2

    key = jax.random.PRNGKey(0)
    kx, kw, kg, kb = jax.random.split(key, 4)

    x = jax.random.normal(kx, (N, C_in, H, W), dtype=jnp.float32)
    conv_w = 0.1 * jax.random.normal(kw, (C_out, C_in, k_size, k_size),
                                     dtype=jnp.float32)
    gamma = 1.0 + 0.1 * jax.random.normal(kg, (C_out,), dtype=jnp.float32)
    beta = 0.1 * jax.random.normal(kb, (C_out,), dtype=jnp.float32)

    out = cnn_block_forward(x, conv_w, gamma, beta, k_size, stride)
    out = jax.block_until_ready(out)

    ref = cnn_block_reference(x, conv_w, gamma, beta, k_size, stride)
    assert out.shape == (N, C_out, H // stride, W // stride), out.shape
    # bf16 MXU operands (f32 accumulation) vs strict-f32 reference tolerance.
    assert jnp.allclose(out, ref, atol=3e-2, rtol=3e-2), \
        float(jnp.max(jnp.abs(out - ref)))

    print("KERNEL_OK")
</pallas_src>

<mosaic_0001>
module attributes {stable_mosaic.version = 11 : i64} {
  func.func @conv_stats_kernel(%arg0: i32, %arg1: memref<128x128xbf16, #tpu.memory_space<vmem>>, %arg2: memref<128x128xbf16, #tpu.memory_space<vmem>>, %arg3: memref<128x128xf32, #tpu.memory_space<vmem>>, %arg4: memref<1x128xf32, #tpu.memory_space<vmem>>, %arg5: memref<1x128xf32, #tpu.memory_space<vmem>>) attributes {dimension_semantics = [#tpu.dimension_semantics<arbitrary>], iteration_bounds = array<i64: 1>, scalar_prefetch = 0 : i64, scratch_operands = 0 : i64, tpu.core_type = #tpu.core_type<tc>, window_params = [{transform_indices = @transform_0, window_bounds = array<i64: 128, 128>}, {pipeline_mode = #tpu.pipeline_mode<synchronous>, transform_indices = @transform_1, window_bounds = array<i64: 128, 128>}, {transform_indices = @transform_2, window_bounds = array<i64: 128, 128>}, {pipeline_mode = #tpu.pipeline_mode<synchronous>, transform_indices = @transform_3, window_bounds = array<i64: 1, 128>}, {pipeline_mode = #tpu.pipeline_mode<synchronous>, transform_indices = @transform_4, window_bounds = array<i64: 1, 128>}]} {
    %c0 = arith.constant 0 : index
    %c0_0 = arith.constant 0 : index
    %0 = vector.load %arg1[%c0, %c0_0] : memref<128x128xbf16, #tpu.memory_space<vmem>>, vector<128x128xbf16>
    %c0_1 = arith.constant 0 : index
    %c0_2 = arith.constant 0 : index
    %1 = vector.load %arg2[%c0_1, %c0_2] : memref<128x128xbf16, #tpu.memory_space<vmem>>, vector<128x128xbf16>
    %cst = arith.constant dense<0.000000e+00> : vector<128x128xf32>
    %2 = tpu.matmul %0, %1, %cst {dimension_numbers = #tpu.dot_dimension_numbers<[1], [0], [0], [1], [0, 0, 1, 1], [], []>} : vector<128x128xbf16>, vector<128x128xbf16>, vector<128x128xf32> -> vector<128x128xf32>
    %c0_3 = arith.constant 0 : index
    %c0_4 = arith.constant 0 : index
    %3 = vector.load %arg3[%c0_3, %c0_4] : memref<128x128xf32, #tpu.memory_space<vmem>>, vector<128x128xf32>
    tpu.vector_store %arg3[%c0_3, %c0_4], %2 {strides = array<i32>} : memref<128x128xf32, #tpu.memory_space<vmem>>, vector<128x128xf32>,
    %c0_i32 = arith.constant 0 : i32
    %4 = arith.cmpi eq, %arg0, %c0_i32 : i32
    %5 = arith.extui %4 : i1 to i32
    %c0_i32_5 = arith.constant 0 : i32
    %6 = arith.cmpi ne, %5, %c0_i32_5 : i32
    scf.if %6 {
      %cst_16 = arith.constant 0.000000e+00 : f32
      %18 = vector.broadcast %cst_16 : f32 to vector<1x128xf32>
      %c0_17 = arith.constant 0 : index
      %c0_18 = arith.constant 0 : index
      %19 = vector.load %arg4[%c0_17, %c0_18] : memref<1x128xf32, #tpu.memory_space<vmem>>, vector<1x128xf32>
      tpu.vector_store %arg4[%c0_17, %c0_18], %18 {strides = array<i32>} : memref<1x128xf32, #tpu.memory_space<vmem>>, vector<1x128xf32>,
      %cst_19 = arith.constant 0.000000e+00 : f32
      %20 = vector.broadcast %cst_19 : f32 to vector<1x128xf32>
      %c0_20 = arith.constant 0 : index
      %c0_21 = arith.constant 0 : index
      %21 = vector.load %arg5[%c0_20, %c0_21] : memref<1x128xf32, #tpu.memory_space<vmem>>, vector<1x128xf32>
      tpu.vector_store %arg5[%c0_20, %c0_21], %20 {strides = array<i32>} : memref<1x128xf32, #tpu.memory_space<vmem>>, vector<1x128xf32>,
    } else {
    }
    %c0_6 = arith.constant 0 : index
    %c0_7 = arith.constant 0 : index
    %7 = vector.load %arg4[%c0_6, %c0_7] : memref<1x128xf32, #tpu.memory_space<vmem>>, vector<1x128xf32>
    %cst_8 = arith.constant dense<0.000000e+00> : vector<128xf32>
    %8 = vector.multi_reduction <add>, %2, %cst_8 [0] : vector<128x128xf32> to vector<128xf32>
    %9 = vector.shape_cast %8 : vector<128xf32> to vector<1x128xf32>
    %10 = arith.addf %7, %9 : vector<1x128xf32>
    %c0_9 = arith.constant 0 : index
    %c0_10 = arith.constant 0 : index
    %11 = vector.load %arg4[%c0_9, %c0_10] : memref<1x128xf32, #tpu.memory_space<vmem>>, vector<1x128xf32>
    tpu.vector_store %arg4[%c0_9, %c0_10], %10 {strides = array<i32>} : memref<1x128xf32, #tpu.memory_space<vmem>>, vector<1x128xf32>,
    %c0_11 = arith.constant 0 : index
    %c0_12 = arith.constant 0 : index
    %12 = vector.load %arg5[%c0_11, %c0_12] : memref<1x128xf32, #tpu.memory_space<vmem>>, vector<1x128xf32>
    %13 = arith.mulf %2, %2 : vector<128x128xf32>
    %cst_13 = arith.constant dense<0.000000e+00> : vector<128xf32>
    %14 = vector.multi_reduction <add>, %13, %cst_13 [0] : vector<128x128xf32> to vector<128xf32>
    %15 = vector.shape_cast %14 : vector<128xf32> to vector<1x128xf32>
    %16 = arith.addf %12, %15 : vector<1x128xf32>
    %c0_14 = arith.constant 0 : index
    %c0_15 = arith.constant 0 : index
    %17 = vector.load %arg5[%c0_14, %c0_15] : memref<1x128xf32, #tpu.memory_space<vmem>>, vector<1x128xf32>
    tpu.vector_store %arg5[%c0_14, %c0_15], %16 {strides = array<i32>} : memref<1x128xf32, #tpu.memory_space<vmem>>, vector<1x128xf32>,
    return
  }
  func.func @transform_0(%arg0: i32) -> (i32, i32) {
    %c0_i32 = arith.constant 0 : i32
    %c0_i32_0 = arith.constant 0 : i32
    return %arg0, %c0_i32 : i32, i32
  }
  func.func @transform_1(%arg0: i32) -> (i32, i32) {
    %c0_i32 = arith.constant 0 : i32
    %c0_i32_0 = arith.constant 0 : i32
    %c0_i32_1 = arith.constant 0 : i32
    return %c0_i32, %c0_i32_0 : i32, i32
  }
  func.func @transform_2(%arg0: i32) -> (i32, i32) {
    %c0_i32 = arith.constant 0 : i32
    %c0_i32_0 = arith.constant 0 : i32
    return %arg0, %c0_i32 : i32, i32
  }
  func.func @transform_3(%arg0: i32) -> (i32, i32) {
    %c0_i32 = arith.constant 0 : i32
    %c0_i32_0 = arith.constant 0 : i32
    %c0_i32_1 = arith.constant 0 : i32
    return %c0_i32, %c0_i32_0 : i32, i32
  }
  func.func @transform_4(%arg0: i32) -> (i32, i32) {
    %c0_i32 = arith.constant 0 : i32
    %c0_i32_0 = arith.constant 0 : i32
    %c0_i32_1 = arith.constant 0 : i32
    return %c0_i32, %c0_i32_0 : i32, i32
  }
}

module attributes {stable_mosaic.version = 11 : i64} {
  func.func @bn_lrelu_kernel(%arg0: i32, %arg1: memref<128x128xf32, #tpu.memory_space<vmem>>, %arg2: memref<1x128xf32, #tpu.memory_space<vmem>>, %arg3: memref<1x128xf32, #tpu.memory_space<vmem>>, %arg4: memref<128x128xf32, #tpu.memory_space<vmem>>) attributes {dimension_semantics = [#tpu.dimension_semantics<parallel>], iteration_bounds = array<i64: 1>, scalar_prefetch = 0 : i64, scratch_operands = 0 : i64, tpu.core_type = #tpu.core_type<tc>, window_params = [{transform_indices = @transform_0, window_bounds = array<i64: 128, 128>}, {pipeline_mode = #tpu.pipeline_mode<synchronous>, transform_indices = @transform_1, window_bounds = array<i64: 1, 128>}, {pipeline_mode = #tpu.pipeline_mode<synchronous>, transform_indices = @transform_2, window_bounds = array<i64: 1, 128>}, {transform_indices = @transform_3, window_bounds = array<i64: 128, 128>}]} {
    %c0 = arith.constant 0 : index
    %c0_0 = arith.constant 0 : index
    %0 = vector.load %arg1[%c0, %c0_0] : memref<128x128xf32, #tpu.memory_space<vmem>>, vector<128x128xf32>
    %c0_1 = arith.constant 0 : index
    %c0_2 = arith.constant 0 : index
    %1 = vector.load %arg2[%c0_1, %c0_2] : memref<1x128xf32, #tpu.memory_space<vmem>>, vector<1x128xf32>
    %2 = vector.broadcast %1 : vector<1x128xf32> to vector<128x128xf32>
    %3 = arith.mulf %0, %2 : vector<128x128xf32>
    %c0_3 = arith.constant 0 : index
    %c0_4 = arith.constant 0 : index
    %4 = vector.load %arg3[%c0_3, %c0_4] : memref<1x128xf32, #tpu.memory_space<vmem>>, vector<1x128xf32>
    %5 = vector.broadcast %4 : vector<1x128xf32> to vector<128x128xf32>
    %6 = arith.addf %3, %5 : vector<128x128xf32>
    %cst = arith.constant 0.000000e+00 : f32
    %7 = vector.broadcast %cst : f32 to vector<128x128xf32>
    %8 = arith.cmpf oge, %6, %7 : vector<128x128xf32>
    %cst_5 = arith.constant 2.000000e-01 : f32
    %9 = vector.broadcast %cst_5 : f32 to vector<128x128xf32>
    %10 = arith.mulf %9, %6 : vector<128x128xf32>
    %11 = arith.select %8, %6, %10 : vector<128x128xi1>, vector<128x128xf32>
    %c0_6 = arith.constant 0 : index
    %c0_7 = arith.constant 0 : index
    %12 = vector.load %arg4[%c0_6, %c0_7] : memref<128x128xf32, #tpu.memory_space<vmem>>, vector<128x128xf32>
    tpu.vector_store %arg4[%c0_6, %c0_7], %11 {strides = array<i32>} : memref<128x128xf32, #tpu.memory_space<vmem>>, vector<128x128xf32>,
    return
  }
  func.func @transform_0(%arg0: i32) -> (i32, i32) {
    %c0_i32 = arith.constant 0 : i32
    %c0_i32_0 = arith.constant 0 : i32
    return %arg0, %c0_i32 : i32, i32
  }
  func.func @transform_1(%arg0: i32) -> (i32, i32) {
    %c0_i32 = arith.constant 0 : i32
    %c0_i32_0 = arith.constant 0 : i32
    %c0_i32_1 = arith.constant 0 : i32
    return %c0_i32, %c0_i32_0 : i32, i32
  }
  func.func @transform_2(%arg0: i32) -> (i32, i32) {
    %c0_i32 = arith.constant 0 : i32
    %c0_i32_0 = arith.constant 0 : i32
    %c0_i32_1 = arith.constant 0 : i32
    return %c0_i32, %c0_i32_0 : i32, i32
  }
  func.func @transform_3(%arg0: i32) -> (i32, i32) {
    %c0_i32 = arith.constant 0 : i32
    %c0_i32_0 = arith.constant 0 : i32
    return %arg0, %c0_i32 : i32, i32
  }
}

</mosaic_0001>

<llo_original>
// kernel: cnn_block_forward.3
$region0: #{cnn_block_forward.3}
  #allocation0 [shape = 'u32[]', space=smem, size = 0x4, offset = 0x4, fixed_abs, tag = 'smem constant byte address 0x4 - core index']
  #allocation1 [shape = 'u32[144,128]{1,0:T(1,128)}', space=vmem, size = 0x12000, scoped, tag = 'internal scratch']
  %s0 = inlined_call_operand.vmem [shape: f32[128,128], index: 0, kind: input, shape index: {}]
  %s1 = inlined_call_operand.vmem [shape: f32[1,128], index: 1, kind: input, shape index: {}]
  %s2 = inlined_call_operand.vmem [shape: f32[1,128], index: 2, kind: input, shape index: {}]
  %s3 = inlined_call_operand.vmem [shape: f32[128,128], index: 3, kind: output, shape index: {}]
  %s4 = sld [smem:[#allocation0]]
  $region22: #{cnn_block_forward.3} parent=0
    _
  %s6 = ssub.s32 1, %s4
  %s7 = scalar_select 0, %s6, %s4
  // Predicated region
  $region2: #{cnn_block_forward.3} parent=0 // pred_check
    _
  $region3: #{cnn_block_forward.3} parent=0 // pred_check_branch
    %9 = sbr.rel (0) target = $region5
  $region4: #{cnn_block_forward.3} parent=0 // pred_region
    _
  $region5: #{cnn_block_forward.3} parent=0 // pred_fallthru
    _
  // Predicated region
  $region6: #{cnn_block_forward.3} parent=0 // pred_check
    _
  $region7: #{cnn_block_forward.3} parent=0 // pred_check_branch
    %11 = sbr.rel (0) target = $region9
  $region8: #{cnn_block_forward.3} parent=0 // pred_region
    _
  $region9: #{cnn_block_forward.3} parent=0 // pred_fallthru
    _
  // Predicated region
  $region10: #{cnn_block_forward.3} parent=0 // pred_check
    _
  $region11: #{cnn_block_forward.3} parent=0 // pred_check_branch
    %13 = sbr.rel (0) target = $region13
  $region12: #{cnn_block_forward.3} parent=0 // pred_region
    _
  $region13: #{cnn_block_forward.3} parent=0 // pred_fallthru
    _
  %v14 = vld [vmem:[%s0] sm:$0xff]
  %v15 = vld [vmem:[%s0 + $0x8] sm:$0xff]
  %v16 = vld [vmem:[%s0 + $0x10] sm:$0xff]
  %v17 = vld [vmem:[%s0 + $0x18] sm:$0xff]
  %v18 = vld [vmem:[%s0 + $0x20] sm:$0xff]
  %v19 = vld [vmem:[%s0 + $0x28] sm:$0xff]
  %v20 = vld [vmem:[%s0 + $0x30] sm:$0xff]
  %v21 = vld [vmem:[%s0 + $0x38] sm:$0xff]
  %v22 = vld [vmem:[%s0 + $0x40] sm:$0xff]
  %v23 = vld [vmem:[%s0 + $0x48] sm:$0xff]
  %v24 = vld [vmem:[%s0 + $0x50] sm:$0xff]
  %v25 = vld [vmem:[%s0 + $0x58] sm:$0xff]
  %v26 = vld [vmem:[%s0 + $0x60] sm:$0xff]
  %v27 = vld [vmem:[%s0 + $0x68] sm:$0xff]
  %v28 = vld [vmem:[%s0 + $0x70] sm:$0xff]
  %v29 = vld [vmem:[%s0 + $0x78] sm:$0xff]
  %v30 = vld [vmem:[%s1] sm:$0x1]
  %v32 = vlaneseq
  %v33 = vshrl.u32 %v32, 7
  %v34 = vsub.s32 0, %v33
  %v35 = vrot.slane %v30, %v34
  %v37 = vmul.f32 %v14, %v35
  %v38 = vmul.f32 %v15, %v35
  %v39 = vmul.f32 %v16, %v35
  %v40 = vmul.f32 %v17, %v35
  %v41 = vmul.f32 %v18, %v35
  %v42 = vmul.f32 %v19, %v35
  %v43 = vmul.f32 %v20, %v35
  %v44 = vmul.f32 %v21, %v35
  %v45 = vmul.f32 %v22, %v35
  %v46 = vmul.f32 %v23, %v35
  %v47 = vmul.f32 %v24, %v35
  %v48 = vmul.f32 %v25, %v35
  %v49 = vmul.f32 %v26, %v35
  %v50 = vmul.f32 %v27, %v35
  %v51 = vmul.f32 %v28, %v35
  %v52 = vmul.f32 %v29, %v35
  %v53 = vld [vmem:[%s2] sm:$0x1]
  %v55 = vlaneseq
  %v56 = vshrl.u32 %v55, 7
  %v57 = vsub.s32 0, %v56
  %v58 = vrot.slane %v53, %v57
  %v60 = vadd.f32 %v37, %v58
  %v61 = vadd.f32 %v38, %v58
  %v62 = vadd.f32 %v39, %v58
  %v63 = vadd.f32 %v40, %v58
  %v64 = vadd.f32 %v41, %v58
  %v65 = vadd.f32 %v42, %v58
  %v66 = vadd.f32 %v43, %v58
  %v67 = vadd.f32 %v44, %v58
  %v68 = vadd.f32 %v45, %v58
  %v69 = vadd.f32 %v46, %v58
  %v70 = vadd.f32 %v47, %v58
  %v71 = vadd.f32 %v48, %v58
  %v72 = vadd.f32 %v49, %v58
  %v73 = vadd.f32 %v50, %v58
  %v74 = vadd.f32 %v51, %v58
  %v75 = vadd.f32 %v52, %v58
  %vm76 = vcmp.ge.f32.partialorder %v60, 0.0
  %vm77 = vcmp.ge.f32.partialorder %v61, 0.0
  %vm78 = vcmp.ge.f32.partialorder %v62, 0.0
  %vm79 = vcmp.ge.f32.partialorder %v63, 0.0
  %vm80 = vcmp.ge.f32.partialorder %v64, 0.0
  %vm81 = vcmp.ge.f32.partialorder %v65, 0.0
  %vm82 = vcmp.ge.f32.partialorder %v66, 0.0
  %vm83 = vcmp.ge.f32.partialorder %v67, 0.0
  %vm84 = vcmp.ge.f32.partialorder %v68, 0.0
  %vm85 = vcmp.ge.f32.partialorder %v69, 0.0
  %vm86 = vcmp.ge.f32.partialorder %v70, 0.0
  %vm87 = vcmp.ge.f32.partialorder %v71, 0.0
  %vm88 = vcmp.ge.f32.partialorder %v72, 0.0
  %vm89 = vcmp.ge.f32.partialorder %v73, 0.0
  %vm90 = vcmp.ge.f32.partialorder %v74, 0.0
  %vm91 = vcmp.ge.f32.partialorder %v75, 0.0
  %v92 = vmul.f32 %v60, 0.2
  %v93 = vmul.f32 %v61, 0.2
  %v94 = vmul.f32 %v62, 0.2
  %v95 = vmul.f32 %v63, 0.2
  %v96 = vmul.f32 %v64, 0.2
  %v97 = vmul.f32 %v65, 0.2
  %v98 = vmul.f32 %v66, 0.2
  %v99 = vmul.f32 %v67, 0.2
  %v100 = vmul.f32 %v68, 0.2
  %v101 = vmul.f32 %v69, 0.2
  %v102 = vmul.f32 %v70, 0.2
  %v103 = vmul.f32 %v71, 0.2
  %v104 = vmul.f32 %v72, 0.2
  %v105 = vmul.f32 %v73, 0.2
  %v106 = vmul.f32 %v74, 0.2
  %v107 = vmul.f32 %v75, 0.2
  %v108 = vsel %vm76, %v60, %v92
  %v109 = vsel %vm77, %v61, %v93
  %v110 = vsel %vm78, %v62, %v94
  %v111 = vsel %vm79, %v63, %v95
  %v112 = vsel %vm80, %v64, %v96
  %v113 = vsel %vm81, %v65, %v97
  %v114 = vsel %vm82, %v66, %v98
  %v115 = vsel %vm83, %v67, %v99
  %v116 = vsel %vm84, %v68, %v100
  %v117 = vsel %vm85, %v69, %v101
  %v118 = vsel %vm86, %v70, %v102
  %v119 = vsel %vm87, %v71, %v103
  %v120 = vsel %vm88, %v72, %v104
  %v121 = vsel %vm89, %v73, %v105
  %v122 = vsel %vm90, %v74, %v106
  %v123 = vsel %vm91, %v75, %v107
  %124 = vst [vmem:[%s3] sm:$0xff] %v108
  %125 = vst [vmem:[%s3 + $0x8] sm:$0xff] %v109
  %126 = vst [vmem:[%s3 + $0x10] sm:$0xff] %v110
  %127 = vst [vmem:[%s3 + $0x18] sm:$0xff] %v111
  %128 = vst [vmem:[%s3 + $0x20] sm:$0xff] %v112
  %129 = vst [vmem:[%s3 + $0x28] sm:$0xff] %v113
  %130 = vst [vmem:[%s3 + $0x30] sm:$0xff] %v114
  %131 = vst [vmem:[%s3 + $0x38] sm:$0xff] %v115
  %132 = vst [vmem:[%s3 + $0x40] sm:$0xff] %v116
  %133 = vst [vmem:[%s3 + $0x48] sm:$0xff] %v117
  %134 = vst [vmem:[%s3 + $0x50] sm:$0xff] %v118
  %135 = vst [vmem:[%s3 + $0x58] sm:$0xff] %v119
  %136 = vst [vmem:[%s3 + $0x60] sm:$0xff] %v120
  %137 = vst [vmem:[%s3 + $0x68] sm:$0xff] %v121
  %138 = vst [vmem:[%s3 + $0x70] sm:$0xff] %v122
  %139 = vst [vmem:[%s3 + $0x78] sm:$0xff] %v123
  // Predicated region
  $region14: #{cnn_block_forward.3} parent=0 // pred_check
    _
  $region15: #{cnn_block_forward.3} parent=0 // pred_check_branch
    %141 = sbr.rel (0) target = $region17
  $region16: #{cnn_block_forward.3} parent=0 // pred_region
    _
  $region17: #{cnn_block_forward.3} parent=0 // pred_fallthru
    _
  // Predicated region
  $region18: #{cnn_block_forward.3} parent=0 // pred_check
    _
  $region19: #{cnn_block_forward.3} parent=0 // pred_check_branch
    %143 = sbr.rel (0) target = $region21
  $region20: #{cnn_block_forward.3} parent=0 // pred_region
    _
  $region21: #{cnn_block_forward.3} parent=0 // pred_fallthru
    _

// kernel: cnn_block_forward.2
$region0: #{cnn_block_forward.2}
  #allocation0 [shape = 'u32[]', space=smem, size = 0x4, offset = 0x4, fixed_abs, tag = 'smem constant byte address 0x4 - core index']
  #allocation1 [shape = 'u32[144,128]{1,0:T(1,128)}', space=vmem, size = 0x12000, scoped, tag = 'internal scratch']
  %s0 = inlined_call_operand.vmem [shape: bf16[128,128], index: 0, kind: input, shape index: {}]
  %s1 = inlined_call_operand.vmem [shape: bf16[128,128], index: 1, kind: input, shape index: {}]
  %s2 = inlined_call_operand.vmem [shape: f32[128,128], index: 2, kind: output, shape index: {0}]
  %s3 = inlined_call_operand.vmem [shape: f32[1,128], index: 3, kind: output, shape index: {1}]
  %s4 = inlined_call_operand.vmem [shape: f32[1,128], index: 4, kind: output, shape index: {2}]
  %5 = xla_tuple %s2, %s3, %s4
  %s6 = sld [smem:[#allocation0]]
  $region38: #{cnn_block_forward.2} parent=0
    _
  %s8 = ssub.s32 1, %s6
  %s9 = scalar_select 0, %s8, %s6
  // Predicated region
  $region2: #{cnn_block_forward.2} parent=0 // pred_check
    _
  $region3: #{cnn_block_forward.2} parent=0 // pred_check_branch
    %11 = sbr.rel (0) target = $region5
  $region4: #{cnn_block_forward.2} parent=0 // pred_region
    _
  $region5: #{cnn_block_forward.2} parent=0 // pred_fallthru
    _
  // Predicated region
  $region6: #{cnn_block_forward.2} parent=0 // pred_check
    _
  $region7: #{cnn_block_forward.2} parent=0 // pred_check_branch
    %13 = sbr.rel (0) target = $region9
  $region8: #{cnn_block_forward.2} parent=0 // pred_region
    _
  $region9: #{cnn_block_forward.2} parent=0 // pred_fallthru
    _
  %v15 = vld [vmem:[%s0] sm:$0xf]
  %v16 = vld [vmem:[%s0 + $0x4] sm:$0xf]
  %v17 = vld [vmem:[%s0 + $0x8] sm:$0xf]
  %v18 = vld [vmem:[%s0 + $0xc] sm:$0xf]
  %v19 = vld [vmem:[%s0 + $0x10] sm:$0xf]
  %v20 = vld [vmem:[%s0 + $0x14] sm:$0xf]
  %v21 = vld [vmem:[%s0 + $0x18] sm:$0xf]
  %v22 = vld [vmem:[%s0 + $0x1c] sm:$0xf]
  %v23 = vld [vmem:[%s0 + $0x20] sm:$0xf]
  %v24 = vld [vmem:[%s0 + $0x24] sm:$0xf]
  %v25 = vld [vmem:[%s0 + $0x28] sm:$0xf]
  %v26 = vld [vmem:[%s0 + $0x2c] sm:$0xf]
  %v27 = vld [vmem:[%s0 + $0x30] sm:$0xf]
  %v28 = vld [vmem:[%s0 + $0x34] sm:$0xf]
  %v29 = vld [vmem:[%s0 + $0x38] sm:$0xf]
  %v30 = vld [vmem:[%s0 + $0x3c] sm:$0xf]
  %v31 = vld [vmem:[%s1] sm:$0xf]
  %v32 = vld [vmem:[%s1 + $0x4] sm:$0xf]
  %v33 = vld [vmem:[%s1 + $0x8] sm:$0xf]
  %v34 = vld [vmem:[%s1 + $0xc] sm:$0xf]
  %v35 = vld [vmem:[%s1 + $0x10] sm:$0xf]
  %v36 = vld [vmem:[%s1 + $0x14] sm:$0xf]
  %v37 = vld [vmem:[%s1 + $0x18] sm:$0xf]
  %v38 = vld [vmem:[%s1 + $0x1c] sm:$0xf]
  %v39 = vld [vmem:[%s1 + $0x20] sm:$0xf]
  %v40 = vld [vmem:[%s1 + $0x24] sm:$0xf]
  %v41 = vld [vmem:[%s1 + $0x28] sm:$0xf]
  %v42 = vld [vmem:[%s1 + $0x2c] sm:$0xf]
  %v43 = vld [vmem:[%s1 + $0x30] sm:$0xf]
  %v44 = vld [vmem:[%s1 + $0x34] sm:$0xf]
  %v45 = vld [vmem:[%s1 + $0x38] sm:$0xf]
  %v46 = vld [vmem:[%s1 + $0x3c] sm:$0xf]
  %v63 = vunpack.c.l.b16 %v15
  %v64 = vunpack.c.l.b16 %v16
  %v65 = vunpack.c.l.b16 %v17
  %v66 = vunpack.c.l.b16 %v18
  %v67 = vunpack.c.l.b16 %v19
  %v68 = vunpack.c.l.b16 %v20
  %v69 = vunpack.c.l.b16 %v21
  %v70 = vunpack.c.l.b16 %v22
  %v71 = vunpack.c.l.b16 %v23
  %v72 = vunpack.c.l.b16 %v24
  %v73 = vunpack.c.l.b16 %v25
  %v74 = vunpack.c.l.b16 %v26
  %v75 = vunpack.c.l.b16 %v27
  %v76 = vunpack.c.l.b16 %v28
  %v77 = vunpack.c.l.b16 %v29
  %v78 = vunpack.c.l.b16 %v30
  %v79 = vpack.c.b16 %v64, %v63
  %v80 = vpack.c.b16 %v66, %v65
  %v81 = vpack.c.b16 %v68, %v67
  %v82 = vpack.c.b16 %v70, %v69
  %v83 = vpack.c.b16 %v72, %v71
  %v84 = vpack.c.b16 %v74, %v73
  %v85 = vpack.c.b16 %v76, %v75
  %v86 = vpack.c.b16 %v78, %v77
  %v111 = vunpack.c.l.b16 %v31
  %v112 = vunpack.c.l.b16 %v32
  %v113 = vunpack.c.l.b16 %v33
  %v114 = vunpack.c.l.b16 %v34
  %v115 = vunpack.c.l.b16 %v35
  %v116 = vunpack.c.l.b16 %v36
  %v117 = vunpack.c.l.b16 %v37
  %v118 = vunpack.c.l.b16 %v38
  %v119 = vunpack.c.l.b16 %v39
  %v120 = vunpack.c.l.b16 %v40
  %v121 = vunpack.c.l.b16 %v41
  %v122 = vunpack.c.l.b16 %v42
  %v123 = vunpack.c.l.b16 %v43
  %v124 = vunpack.c.l.b16 %v44
  %v125 = vunpack.c.l.b16 %v45
  %v126 = vunpack.c.l.b16 %v46
  %v127 = vpack.c.b16 %v112, %v111
  %v128 = vpack.c.b16 %v114, %v113
  %v129 = vpack.c.b16 %v116, %v115
  %v130 = vpack.c.b16 %v118, %v117
  %v131 = vpack.c.b16 %v120, %v119
  %v132 = vpack.c.b16 %v122, %v121
  %v133 = vpack.c.b16 %v124, %v123
  %v134 = vpack.c.b16 %v126, %v125
  %143 = vmatprep.subr.bf16.mxu0 0
  %144 = vmatpush1.bf16.msra.mxu0 %v127
  %145 = vmatprep.subr.bf16.mxu0 0
  %146 = vmatpush1.bf16.msra.mxu0 %v128
  %147 = vmatprep.subr.bf16.mxu0 0
  %148 = vmatpush1.bf16.msra.mxu0 %v129
  %149 = vmatprep.subr.bf16.mxu0 0
  %150 = vmatpush1.bf16.msra.mxu0 %v130
  %151 = vmatprep.subr.bf16.mxu0 0
  %152 = vmatpush1.bf16.msra.mxu0 %v131
  %153 = vmatprep.subr.bf16.mxu0 0
  %154 = vmatpush1.bf16.msra.mxu0 %v132
  %155 = vmatprep.subr.bf16.mxu0 0
  %156 = vmatpush1.bf16.msra.mxu0 %v133
  %157 = vmatprep.subr.bf16.mxu0 0
  %158 = vmatpush1.bf16.msra.mxu0 %v134
  %159 = vmatprep.subr.bf16.mxu0 0
  %160 = vmatpush1.bf16.msra.mxu0 0
  %161 = vmatprep.subr.bf16.mxu0 0
  %162 = vmatpush1.bf16.msra.mxu0 0
  %163 = vmatprep.subr.bf16.mxu0 0
  %164 = vmatpush1.bf16.msra.mxu0 0
  %165 = vmatprep.subr.bf16.mxu0 0
  %166 = vmatpush1.bf16.msra.mxu0 0
  %167 = vmatprep.subr.bf16.mxu0 0
  %168 = vmatpush1.bf16.msra.mxu0 0
  %169 = vmatprep.subr.bf16.mxu0 0
  %170 = vmatpush1.bf16.msra.mxu0 0
  %171 = vmatprep.subr.bf16.mxu0 0
  %172 = vmatpush1.bf16.msra.mxu0 0
  %173 = vmatprep.subr.bf16.mxu0 0
  %174 = vmatpush1.bf16.msra.mxu0 0
  %175 = vmatprep.mubr.bf16.mxu0 0
  %176 = vmatmul.mubr.bf16.gmra.mrb[0].mxu0 %v79
  %v177 = vpop.f32.mrb[0].mxu0
  %v178 = vadd.f32 0.0, %v177
  %v179 = vpop.f32.mrb[0].mxu0
  %v180 = vpop.f32.mrb[0].mxu0
  %v181 = vadd.f32 0.0, %v180
  %v182 = vpop.f32.mrb[0].mxu0
  %183 = vmatprep.mubr.bf16.mxu0 0
  %184 = vmatmul.mubr.bf16.gmra.mrb[0].mxu0 %v80
  %v185 = vpop.f32.mrb[0].mxu0
  %v186 = vadd.f32 0.0, %v185
  %v187 = vpop.f32.mrb[0].mxu0
  %v188 = vpop.f32.mrb[0].mxu0
  %v189 = vadd.f32 0.0, %v188
  %v190 = vpop.f32.mrb[0].mxu0
  %191 = vmatprep.mubr.bf16.mxu0 0
  %192 = vmatmul.mubr.bf16.gmra.mrb[0].mxu0 %v81
  %v193 = vpop.f32.mrb[0].mxu0
  %v194 = vadd.f32 0.0, %v193
  %v195 = vpop.f32.mrb[0].mxu0
  %v196 = vpop.f32.mrb[0].mxu0
  %v197 = vadd.f32 0.0, %v196
  %v198 = vpop.f32.mrb[0].mxu0
  %199 = vmatprep.mubr.bf16.mxu0 0
  %200 = vmatmul.mubr.bf16.gmra.mrb[0].mxu0 %v82
  %v201 = vpop.f32.mrb[0].mxu0
  %v202 = vadd.f32 0.0, %v201
  %v203 = vpop.f32.mrb[0].mxu0
  %v204 = vpop.f32.mrb[0].mxu0
  %v205 = vadd.f32 0.0, %v204
  %v206 = vpop.f32.mrb[0].mxu0
  %207 = vmatprep.mubr.bf16.mxu0 0
  %208 = vmatmul.mubr.bf16.gmra.mrb[0].mxu0 %v83
  %v209 = vpop.f32.mrb[0].mxu0
  %v210 = vadd.f32 0.0, %v209
  %v211 = vpop.f32.mrb[0].mxu0
  %v212 = vpop.f32.mrb[0].mxu0
  %v213 = vadd.f32 0.0, %v212
  %v214 = vpop.f32.mrb[0].mxu0
  %215 = vmatprep.mubr.bf16.mxu0 0
  %216 = vmatmul.mubr.bf16.gmra.mrb[0].mxu0 %v84
  %v217 = vpop.f32.mrb[0].mxu0
  %v218 = vadd.f32 0.0, %v217
  %v219 = vpop.f32.mrb[0].mxu0
  %v220 = vpop.f32.mrb[0].mxu0
  %v221 = vadd.f32 0.0, %v220
  %v222 = vpop.f32.mrb[0].mxu0
  %223 = vmatprep.mubr.bf16.mxu0 0
  %224 = vmatmul.mubr.bf16.gmra.mrb[0].mxu0 %v85
  %v225 = vpop.f32.mrb[0].mxu0
  %v226 = vadd.f32 0.0, %v225
  %v227 = vpop.f32.mrb[0].mxu0
  %v228 = vpop.f32.mrb[0].mxu0
  %v229 = vadd.f32 0.0, %v228
  %v230 = vpop.f32.mrb[0].mxu0
  %231 = vmatprep.mubr.bf16.mxu0 0
  %232 = vmatmul.mubr.bf16.gmra.mrb[0].mxu0 %v86
  %v233 = vpop.f32.mrb[0].mxu0
  %v234 = vadd.f32 0.0, %v233
  %v235 = vpop.f32.mrb[0].mxu0
  %v236 = vpop.f32.mrb[0].mxu0
  %v237 = vadd.f32 0.0, %v236
  %v238 = vpop.f32.mrb[0].mxu0
  %239 = vdwg.mxu0
  %240 = vst [vmem:[%s2] sm:$0xff] %v178
  %241 = vst [vmem:[%s2 + $0x8] sm:$0xff] %v181
  %242 = vst [vmem:[%s2 + $0x10] sm:$0xff] %v186
  %243 = vst [vmem:[%s2 + $0x18] sm:$0xff] %v189
  %244 = vst [vmem:[%s2 + $0x20] sm:$0xff] %v194
  %245 = vst [vmem:[%s2 + $0x28] sm:$0xff] %v197
  %246 = vst [vmem:[%s2 + $0x30] sm:$0xff] %v202
  %247 = vst [vmem:[%s2 + $0x38] sm:$0xff] %v205
  %248 = vst [vmem:[%s2 + $0x40] sm:$0xff] %v210
  %249 = vst [vmem:[%s2 + $0x48] sm:$0xff] %v213
  %250 = vst [vmem:[%s2 + $0x50] sm:$0xff] %v218
  %251 = vst [vmem:[%s2 + $0x58] sm:$0xff] %v221
  %252 = vst [vmem:[%s2 + $0x60] sm:$0xff] %v226
  %253 = vst [vmem:[%s2 + $0x68] sm:$0xff] %v229
  %254 = vst [vmem:[%s2 + $0x70] sm:$0xff] %v234
  %255 = vst [vmem:[%s2 + $0x78] sm:$0xff] %v237
  %p256 = scmp.eq.s32.totalorder 0, 0
  // Predicated region
  $region10: #{cnn_block_forward.2} parent=0 // pred_check
    %p257 = pneg %p256
  $region11: #{cnn_block_forward.2} parent=0 // pred_check_branch
    %259 = sbr.rel (%p257) target = $region13
  $region12: #{cnn_block_forward.2} parent=0 // pred_region
    %260 = vst [vmem:[%s3] sm:$0x1] 0.0
    %261 = vst [vmem:[%s4] sm:$0x1] 0.0
  $region13: #{cnn_block_forward.2} parent=0 // pred_fallthru
    _
  %v262 = vld [vmem:[%s3] sm:$0x1]
  %v263 = vadd.f32 %v178, %v181
  %v264 = vadd.f32 %v263, %v186
  %v265 = vadd.f32 %v264, %v189
  %v266 = vadd.f32 %v265, %v194
  %v267 = vadd.f32 %v266, %v197
  %v268 = vadd.f32 %v267, %v202
  %v269 = vadd.f32 %v268, %v205
  %v270 = vadd.f32 %v269, %v210
  %v271 = vadd.f32 %v270, %v213
  %v272 = vadd.f32 %v271, %v218
  %v273 = vadd.f32 %v272, %v221
  %v274 = vadd.f32 %v273, %v226
  %v275 = vadd.f32 %v274, %v229
  %v276 = vadd.f32 %v275, %v234
  %v277 = vadd.f32 %v276, %v237
  %v278 = vrot.slane %v277, 4
  %v279 = vadd.f32 %v277, %v278
  %v280 = vrot.slane %v279, 2
  %v281 = vadd.f32 %v279, %v280
  %v282 = vrot.slane %v281, 1
  %v283 = vadd.f32 %v281, %v282
  %v284 = vadd.f32 %v262, %v283
  %285 = vst [vmem:[%s3] sm:$0x1] %v284
  %v286 = vld [vmem:[%s4] sm:$0x1]
  %v287 = vmul.f32 %v178, %v178
  %v288 = vmul.f32 %v181, %v181
  %v289 = vmul.f32 %v186, %v186
  %v290 = vmul.f32 %v189, %v189
  %v291 = vmul.f32 %v194, %v194
  %v292 = vmul.f32 %v197, %v197
  %v293 = vmul.f32 %v202, %v202
  %v294 = vmul.f32 %v205, %v205
  %v295 = vmul.f32 %v210, %v210
  %v296 = vmul.f32 %v213, %v213
  %v297 = vmul.f32 %v218, %v218
  %v298 = vmul.f32 %v221, %v221
  %v299 = vmul.f32 %v226, %v226
  %v300 = vmul.f32 %v229, %v229
  %v301 = vmul.f32 %v234, %v234
  %v302 = vmul.f32 %v237, %v237
  %v303 = vadd.f32 %v287, %v288
  %v304 = vadd.f32 %v303, %v289
  %v305 = vadd.f32 %v304, %v290
  %v306 = vadd.f32 %v305, %v291
  %v307 = vadd.f32 %v306, %v292
  %v308 = vadd.f32 %v307, %v293
  %v309 = vadd.f32 %v308, %v294
  %v310 = vadd.f32 %v309, %v295
  %v311 = vadd.f32 %v310, %v296
  %v312 = vadd.f32 %v311, %v297
  %v313 = vadd.f32 %v312, %v298
  %v314 = vadd.f32 %v313, %v299
  %v315 = vadd.f32 %v314, %v300
  %v316 = vadd.f32 %v315, %v301
  %v317 = vadd.f32 %v316, %v302
  %v318 = vrot.slane %v317, 4
  %v319 = vadd.f32 %v317, %v318
  %v320 = vrot.slane %v319, 2
  %v321 = vadd.f32 %v319, %v320
  %v322 = vrot.slane %v321, 1
  %v323 = vadd.f32 %v321, %v322
  %v324 = vadd.f32 %v286, %v323
  %325 = vst [vmem:[%s4] sm:$0x1] %v324
  // Predicated region
  $region14: #{cnn_block_forward.2} parent=0 // pred_check
    _
  $region15: #{cnn_block_forward.2} parent=0 // pred_check_branch
    %327 = sbr.rel (0) target = $region17
  $region16: #{cnn_block_forward.2} parent=0 // pred_region
    _
  $region17: #{cnn_block_forward.2} parent=0 // pred_fallthru
    _
  // Predicated region
  $region18: #{cnn_block_forward.2} parent=0 // pred_check
    _
  $region19: #{cnn_block_forward.2} parent=0 // pred_check_branch
    %329 = sbr.rel (0) target = $region21
  $region20: #{cnn_block_forward.2} parent=0 // pred_region
    _
  $region21: #{cnn_block_forward.2} parent=0 // pred_fallthru
    _
  // Predicated region
  $region22: #{cnn_block_forward.2} parent=0 // pred_check
    _
  $region23: #{cnn_block_forward.2} parent=0 // pred_check_branch
    %331 = sbr.rel (0) target = $region25
  $region24: #{cnn_block_forward.2} parent=0 // pred_region
    _
  $region25: #{cnn_block_forward.2} parent=0 // pred_fallthru
    _
  // Predicated region
  $region26: #{cnn_block_forward.2} parent=0 // pred_check
    _
  $region27: #{cnn_block_forward.2} parent=0 // pred_check_branch
    %333 = sbr.rel (0) target = $region29
  $region28: #{cnn_block_forward.2} parent=0 // pred_region
    _
  $region29: #{cnn_block_forward.2} parent=0 // pred_fallthru
    _
  // Predicated region
  $region30: #{cnn_block_forward.2} parent=0 // pred_check
    _
  $region31: #{cnn_block_forward.2} parent=0 // pred_check_branch
    %335 = sbr.rel (0) target = $region33
  $region32: #{cnn_block_forward.2} parent=0 // pred_region
    _
  $region33: #{cnn_block_forward.2} parent=0 // pred_fallthru
    _
  // Predicated region
  $region34: #{cnn_block_forward.2} parent=0 // pred_check
    _
  $region35: #{cnn_block_forward.2} parent=0 // pred_check_branch
    %337 = sbr.rel (0) target = $region37
  $region36: #{cnn_block_forward.2} parent=0 // pred_region
    _
  $region37: #{cnn_block_forward.2} parent=0 // pred_fallthru
    _

</llo_original>
